<compile_context>
chip_gen: v7x
topology: tpu7x:2x2x1
jax: 0.10.0
libtpu: 0.0.40
codegen_flags: <defaults>
</compile_context>

<pallas_src>
import functools

import jax
import jax.numpy as jnp
from jax.experimental import pallas as pl
from jax.experimental.pallas import tpu as pltpu

ALPHA = 0.25
NUM_CLASSES = 20
_LANES = 128


def _round_up(a, b):
    return ((a + b - 1) // b) * b


def _detect_num_cores():
    """TensorCores per chip: v7x has 2; v5e/v6e (and unknown) -> 1 (safe)."""
    try:
        kind = jax.devices()[0].device_kind.lower()
    except Exception:
        return 1
    return 2 if ("v7" in kind or "7x" in kind) else 1


def _focal_kernel(x_ref, y_ref, loss_ref):
    """Per-tile focal_loss_alt terms reduced onto a small resident accumulator.

    x_ref    : (tile_r, 128) logits (bf16/f32), 128//cls_pad anchors folded/row.
    y_ref    : (tile_r, 128) int8 codes: 1 = this lane is the anchor's class
               (t=1), 0 = real class lane of a valid anchor (t=0),
               -1 = ignored anchor / padded class lane / padded anchor.
    loss_ref : (8, 128) f32 accumulator, resident across the reduction axis.
    """
    @pl.when(pl.program_id(1) == 0)
    def _():
        loss_ref[...] = jnp.zeros_like(loss_ref)

    x = x_ref[...].astype(jnp.float32)
    enc = y_ref[...].astype(jnp.int32)
    pos = enc == 1

    # focal_loss_alt: xt = x*(2t-1); pt = sigmoid(2*xt+1); loss = -w*log(pt)/2
    xt = jnp.where(pos, x, -x)                       # (2t-1) is +/-1
    z = 2.0 * xt + 1.0
    # numerically stable log(sigmoid(z)) = min(z,0) - log1p(exp(-|z|))  (EUP)
    log_pt = jnp.minimum(z, 0.0) - jnp.log1p(jnp.exp(-jnp.abs(z)))
    # coeff = -0.5*(alpha*t + (1-alpha)*(1-t)); zero on ignore/pad lanes
    coeff = jnp.where(pos, -0.5 * ALPHA,
                      jnp.where(enc == 0, -0.5 * (1.0 - ALPHA), 0.0))
    term = coeff * log_pt                            # (tile_r, 128)

    # Leading-axis reduce = sublane-aligned VALU adds onto the (8,128) block.
    rows = term.shape[0] // 8
    loss_ref[...] += term.reshape(rows, 8, _LANES).sum(axis=0)


@functools.partial(jax.jit, static_argnums=(2, 3, 4))
def _focal_loss_impl(cls_preds, cls_targets, tile_rows, num_cores, input_dtype):
    B, A, C = cls_preds.shape
    N = B * A
    assert C <= _LANES, "num_classes must be <= 128 for the lane-folded layout"

    cls_pad = max(8, pl.next_power_of_2(C))      # 20 -> 32; divides 128
    fold = _LANES // cls_pad                     # anchors folded per 128-lane row

    r0 = pl.cdiv(N, fold)
    tile_r = min(_round_up(tile_rows, 32),
                 _round_up(pl.cdiv(r0, num_cores), 32))
    steps = pl.cdiv(r0, num_cores * tile_r)
    r = num_cores * steps * tile_r               # folded rows after padding
    n_pad = r * fold                             # anchor rows after padding

    # ---- packing pass (fused under jit) ------------------------------------
    x = cls_preds.reshape(N, C)
    if input_dtype is not None:
        x = x.astype(input_dtype)                # bf16: halves the logits HBM stream
    x = jnp.pad(x, ((0, n_pad - N), (0, cls_pad - C)))
    x_packed = x.reshape(r, _LANES)

    y = cls_targets.reshape(N).astype(jnp.int32)
    y = jnp.pad(y, (0, n_pad - N), constant_values=-1)[:, None]
    cls_ids = jnp.arange(1, cls_pad + 1, dtype=jnp.int32)[None, :]
    lane_real = (jnp.arange(cls_pad, dtype=jnp.int32) < C)[None, :]
    enc = jnp.where(y == cls_ids, 1, 0)
    enc = jnp.where((y > -1) & lane_real, enc, -1).astype(jnp.int8)
    y_packed = enc.reshape(r, _LANES)

    # num_pos computed here (fuses with the packing pass); no in-kernel counter.
    num_pos = jnp.sum((cls_targets > 0).astype(jnp.float32))

    # ---- pallas call --------------------------------------------------------
    row_idx = lambda p, j: (p * steps + j, 0)
    core_sem = (getattr(pltpu, "CORE_PARALLEL", pltpu.PARALLEL)
                if num_cores > 1 else pltpu.ARBITRARY)

    loss_parts = pl.pallas_call(
        _focal_kernel,
        out_shape=jax.ShapeDtypeStruct((num_cores * 8, _LANES), jnp.float32),
        grid_spec=pltpu.PrefetchScalarGridSpec(
            num_scalar_prefetch=0,
            grid=(num_cores, steps),
            in_specs=[pl.BlockSpec((tile_r, _LANES), row_idx),
                      pl.BlockSpec((tile_r, _LANES), row_idx)],
            out_specs=pl.BlockSpec((8, _LANES), lambda p, j: (p, 0)),
        ),
        compiler_params=pltpu.CompilerParams(
            dimension_semantics=(core_sem, pltpu.ARBITRARY),
            vmem_limit_bytes=32 * 1024 * 1024),
    )(x_packed, y_packed)

    # NOTE: division is unguarded (inf/nan if num_pos == 0), matching the
    # original module's `cls_loss / num_pos`.
    return jnp.sum(loss_parts) / num_pos


def focal_loss_forward(cls_preds, cls_targets, *, tile_rows=2048,
                       num_cores=None, input_dtype=jnp.bfloat16):
    """cls_preds: [B, A, C] float, cls_targets: [B, A] int.

    Returns scalar loss = sum(focal_loss_alt terms over valid anchors) / num_pos.
    Set input_dtype=None to keep full f32 logits end-to-end.
    """
    if num_cores is None:
        num_cores = _detect_num_cores()
    return _focal_loss_impl(cls_preds, cls_targets, int(tile_rows),
                            int(num_cores), input_dtype)


def _reference(cls_preds, cls_targets):
    """Plain-JAX reproduction of FocalLoss.forward / focal_loss_alt."""
    B, A, C = cls_preds.shape
    x = cls_preds.reshape(-1, C).astype(jnp.float32)
    y = cls_targets.reshape(-1).astype(jnp.int32)
    valid = (y > -1).astype(jnp.float32)[:, None]
    t = (y[:, None] == (jnp.arange(C)[None, :] + 1)).astype(jnp.float32)
    xt = x * (2.0 * t - 1.0)
    pt = jax.nn.sigmoid(2.0 * xt + 1.0)
    w = ALPHA * t + (1.0 - ALPHA) * (1.0 - t)
    loss = jnp.sum(-w * jnp.log(pt) / 2.0 * valid)
    num_pos = jnp.sum((y > 0).astype(jnp.float32))
    return loss / num_pos


if __name__ == "__main__":
    key = jax.random.PRNGKey(0)
    k1, k2 = jax.random.split(key)

    B, A, C = 2, 64, NUM_CLASSES          # batch=2, anchors=64, classes=20
    cls_preds = jax.random.normal(k1, (B, A, C), dtype=jnp.float32)
    # labels in {-1 (ignore), 0 (background), 1..C (positive classes)}
    cls_targets = jax.random.randint(k2, (B, A), minval=-1, maxval=C + 1,
                                     dtype=jnp.int32)
    # guarantee at least one positive so num_pos > 0
    cls_targets = cls_targets.at[0, 0].set(3)

    loss = focal_loss_forward(cls_preds, cls_targets)
    loss = jax.block_until_ready(loss)

    # Kernel reads logits as bf16 by default; compare against the reference
    # evaluated on the same bf16-quantized logits.
    ref = _reference(cls_preds.astype(jnp.bfloat16).astype(jnp.float32),
                     cls_targets)
    assert jnp.allclose(loss, ref, rtol=1e-4, atol=1e-5), (loss, ref)

    print("KERNEL_OK")
</pallas_src>

<mosaic_0001>
module attributes {stable_mosaic.version = 11 : i64} {
  func.func @_focal_kernel(%arg0: i32, %arg1: i32, %arg2: memref<32x128xbf16, #tpu.memory_space<vmem>>, %arg3: memref<32x128xi8, #tpu.memory_space<vmem>>, %arg4: memref<8x128xf32, #tpu.memory_space<vmem>>) attributes {dimension_semantics = [#tpu.dimension_semantics<arbitrary>, #tpu.dimension_semantics<arbitrary>], iteration_bounds = array<i64: 1, 1>, scalar_prefetch = 0 : i64, scratch_operands = 0 : i64, tpu.core_type = #tpu.core_type<tc>, window_params = [{transform_indices = @transform_0, window_bounds = array<i64: 32, 128>}, {transform_indices = @transform_1, window_bounds = array<i64: 32, 128>}, {transform_indices = @transform_2, window_bounds = array<i64: 8, 128>}]} {
    %c0_i32 = arith.constant 0 : i32
    %0 = arith.cmpi eq, %arg1, %c0_i32 : i32
    %1 = arith.extui %0 : i1 to i32
    %c0_i32_0 = arith.constant 0 : i32
    %2 = arith.cmpi ne, %1, %c0_i32_0 : i32
    scf.if %2 {
      %cst_17 = arith.constant 0.000000e+00 : f32
      %37 = vector.broadcast %cst_17 : f32 to vector<8x128xf32>
      %c0_18 = arith.constant 0 : index
      %c0_19 = arith.constant 0 : index
      %38 = vector.load %arg4[%c0_18, %c0_19] : memref<8x128xf32, #tpu.memory_space<vmem>>, vector<8x128xf32>
      tpu.vector_store %arg4[%c0_18, %c0_19], %37 {strides = array<i32>} : memref<8x128xf32, #tpu.memory_space<vmem>>, vector<8x128xf32>,
    } else {
    }
    %c0 = arith.constant 0 : index
    %c0_1 = arith.constant 0 : index
    %3 = vector.load %arg2[%c0, %c0_1] : memref<32x128xbf16, #tpu.memory_space<vmem>>, vector<32x128xbf16>
    %4 = arith.extf %3 : vector<32x128xbf16> to vector<32x128xf32>
    %c0_2 = arith.constant 0 : index
    %c0_3 = arith.constant 0 : index
    %5 = vector.load %arg3[%c0_2, %c0_3] : memref<32x128xi8, #tpu.memory_space<vmem>>, vector<32x128xi8>
    %6 = arith.extsi %5 : vector<32x128xi8> to vector<32x128xi32>
    %c1_i32 = arith.constant 1 : i32
    %7 = vector.broadcast %c1_i32 : i32 to vector<32x128xi32>
    %8 = arith.cmpi eq, %6, %7 : vector<32x128xi32>
    %cst = arith.constant 0.000000e+00 : f32
    %9 = vector.broadcast %cst : f32 to vector<32x128xf32>
    %10 = arith.subf %9, %4 : vector<32x128xf32>
    %11 = arith.select %8, %4, %10 : vector<32x128xi1>, vector<32x128xf32>
    %cst_4 = arith.constant 2.000000e+00 : f32
    %12 = vector.broadcast %cst_4 : f32 to vector<32x128xf32>
    %13 = arith.mulf %12, %11 : vector<32x128xf32>
    %cst_5 = arith.constant 1.000000e+00 : f32
    %14 = vector.broadcast %cst_5 : f32 to vector<32x128xf32>
    %15 = arith.addf %13, %14 : vector<32x128xf32>
    %cst_6 = arith.constant 0.000000e+00 : f32
    %16 = vector.broadcast %cst_6 : f32 to vector<32x128xf32>
    %17 = arith.minimumf %15, %16 : vector<32x128xf32>
    %18 = math.absf %15 : vector<32x128xf32>
    %cst_7 = arith.constant 0.000000e+00 : f32
    %19 = vector.broadcast %cst_7 : f32 to vector<32x128xf32>
    %20 = arith.subf %19, %18 : vector<32x128xf32>
    %21 = math.exp %20 : vector<32x128xf32>
    %22 = math.log1p %21 : vector<32x128xf32>
    %23 = arith.subf %17, %22 : vector<32x128xf32>
    %c0_i32_8 = arith.constant 0 : i32
    %24 = vector.broadcast %c0_i32_8 : i32 to vector<32x128xi32>
    %25 = arith.cmpi eq, %6, %24 : vector<32x128xi32>
    %cst_9 = arith.constant -3.750000e-01 : f32
    %cst_10 = arith.constant 0.000000e+00 : f32
    %26 = vector.broadcast %cst_9 : f32 to vector<32x128xf32>
    %27 = vector.broadcast %cst_10 : f32 to vector<32x128xf32>
    %28 = arith.select %25, %26, %27 : vector<32x128xi1>, vector<32x128xf32>
    %cst_11 = arith.constant -1.250000e-01 : f32
    %29 = vector.broadcast %cst_11 : f32 to vector<32x128xf32>
    %30 = arith.select %8, %29, %28 : vector<32x128xi1>, vector<32x128xf32>
    %31 = arith.mulf %30, %23 : vector<32x128xf32>
    %c0_12 = arith.constant 0 : index
    %c0_13 = arith.constant 0 : index
    %32 = vector.load %arg4[%c0_12, %c0_13] : memref<8x128xf32, #tpu.memory_space<vmem>>, vector<8x128xf32>
    %33 = vector.shape_cast %31 : vector<32x128xf32> to vector<4x8x128xf32>
    %cst_14 = arith.constant dense<0.000000e+00> : vector<8x128xf32>
    %34 = vector.multi_reduction <add>, %33, %cst_14 [0] : vector<4x8x128xf32> to vector<8x128xf32>
    %35 = arith.addf %32, %34 : vector<8x128xf32>
    %c0_15 = arith.constant 0 : index
    %c0_16 = arith.constant 0 : index
    %36 = vector.load %arg4[%c0_15, %c0_16] : memref<8x128xf32, #tpu.memory_space<vmem>>, vector<8x128xf32>
    tpu.vector_store %arg4[%c0_15, %c0_16], %35 {strides = array<i32>} : memref<8x128xf32, #tpu.memory_space<vmem>>, vector<8x128xf32>,
    return
  }
  func.func @transform_0(%arg0: i32, %arg1: i32) -> (i32, i32) {
    %c1_i32 = arith.constant 1 : i32
    %0 = arith.muli %arg0, %c1_i32 : i32
    %1 = arith.addi %0, %arg1 : i32
    %c0_i32 = arith.constant 0 : i32
    %c0_i32_0 = arith.constant 0 : i32
    return %1, %c0_i32 : i32, i32
  }
  func.func @transform_1(%arg0: i32, %arg1: i32) -> (i32, i32) {
    %c1_i32 = arith.constant 1 : i32
    %0 = arith.muli %arg0, %c1_i32 : i32
    %1 = arith.addi %0, %arg1 : i32
    %c0_i32 = arith.constant 0 : i32
    %c0_i32_0 = arith.constant 0 : i32
    return %1, %c0_i32 : i32, i32
  }
  func.func @transform_2(%arg0: i32, %arg1: i32) -> (i32, i32) {
    %c0_i32 = arith.constant 0 : i32
    %c0_i32_0 = arith.constant 0 : i32
    return %arg0, %c0_i32 : i32, i32
  }
}

</mosaic_0001>

<llo_original>
// kernel: _focal_loss_impl.1
$region0: #{_focal_loss_impl.1}
  #allocation0 [shape = 'u32[]', space=smem, size = 0x4, offset = 0x4, fixed_abs, tag = 'smem constant byte address 0x4 - core index']
  #allocation1 [shape = 'u32[144,128]{1,0:T(1,128)}', space=vmem, size = 0x12000, scoped, tag = 'internal scratch']
  %s0 = inlined_call_operand.vmem [shape: bf16[32,128], index: 0, kind: input, shape index: {}]
  %s1 = inlined_call_operand.vmem [shape: s8[32,128], index: 1, kind: input, shape index: {}]
  %s2 = inlined_call_operand.vmem [shape: f32[8,128], index: 2, kind: output, shape index: {}]
  %s3 = sld [smem:[#allocation0]]
  $region22: #{_focal_loss_impl.1} parent=0
    _
  %s5 = ssub.s32 1, %s3
  %s6 = scalar_select 0, %s5, %s3
  // Predicated region
  $region2: #{_focal_loss_impl.1} parent=0 // pred_check
    _
  $region3: #{_focal_loss_impl.1} parent=0 // pred_check_branch
    %8 = sbr.rel (0) target = $region5
  $region4: #{_focal_loss_impl.1} parent=0 // pred_region
    %s9 = sadd.s32 0, 0
    %s10 = smul.u32 4, %s9
    %p11 = scmp.lt.s32.totalorder %s10, 3
    %s12 = scalar_select %p11, %s10, 3
    %s13 = smul.addr %s12, 4
    %s14 = scalar_lea.vmem %s0, %s13
    %s15 = sadd.s32 0, 0
    %s16 = smul.u32 4, %s15
  $region5: #{_focal_loss_impl.1} parent=0 // pred_fallthru
    _
  // Predicated region
  $region6: #{_focal_loss_impl.1} parent=0 // pred_check
    _
  $region7: #{_focal_loss_impl.1} parent=0 // pred_check_branch
    %18 = sbr.rel (0) target = $region9
  $region8: #{_focal_loss_impl.1} parent=0 // pred_region
    %s19 = sadd.s32 0, 0
    %p20 = scmp.lt.s32.totalorder %s19, 0
    %s21 = scalar_select %p20, %s19, 0
    %s22 = smul.addr %s21, 8
    %s23 = scalar_lea.vmem %s1, %s22
    %s24 = sadd.s32 0, 0
  $region9: #{_focal_loss_impl.1} parent=0 // pred_fallthru
    _
  %s25 = sadd.s32 0, 0
  %s26 = smul.u32 4, %s25
  %p27 = scmp.lt.s32.totalorder %s26, 3
  %s28 = scalar_select %p27, %s26, 3
  %s29 = smul.addr %s28, 4
  %s30 = scalar_lea.vmem %s0, %s29
  %s31 = sadd.s32 0, 0
  %p32 = scmp.lt.s32.totalorder %s31, 0
  %s33 = scalar_select %p32, %s31, 0
  %s34 = smul.addr %s33, 8
  %s35 = scalar_lea.vmem %s1, %s34
  %s36 = sadd.s32 0, 0
  %s37 = smul.u32 4, %s36
  %p38 = scmp.lt.s32.totalorder %s37, 3
  %s39 = scalar_select %p38, %s37, 3
  %s40 = smul.addr %s39, 4
  %s41 = scalar_lea.vmem %s0, %s40
  %s42 = sadd.s32 0, 0
  %s43 = smul.u32 4, %s42
  %s44 = sadd.s32 0, 0
  %p45 = scmp.lt.s32.totalorder %s44, 0
  %s46 = scalar_select %p45, %s44, 0
  %s47 = smul.addr %s46, 8
  %s48 = scalar_lea.vmem %s1, %s47
  %s49 = sadd.s32 0, 0
  %p50 = scmp.eq.s32.totalorder 0, 0
  // Predicated region
  $region10: #{_focal_loss_impl.1} parent=0 // pred_check
    %p51 = pneg %p50
  $region11: #{_focal_loss_impl.1} parent=0 // pred_check_branch
    %53 = sbr.rel (%p51) target = $region13
  $region12: #{_focal_loss_impl.1} parent=0 // pred_region
    %54 = vst [vmem:[%s2] sm:$0xff] 0.0
  $region13: #{_focal_loss_impl.1} parent=0 // pred_fallthru
    _
  %v55 = vld [vmem:[%s41] sm:$0xf]
  %v56 = vld [vmem:[%s41 + $0x4] sm:$0xf]
  %v57 = vld [vmem:[%s41 + $0x8] sm:$0xf]
  %v58 = vld [vmem:[%s41 + $0xc] sm:$0xf]
  %v59 = vunpack.c.l.bf16 %v55
  %v60 = vunpack.c.l.bf16 %v56
  %v61 = vunpack.c.l.bf16 %v57
  %v62 = vunpack.c.l.bf16 %v58
  %v63 = vld [vmem:[%s48] sm:$0xff]
  %v64 = vunpack.c.0.s8 %v63
  %v65 = vunpack.c.1.s8 %v63
  %v66 = vunpack.c.2.s8 %v63
  %v67 = vunpack.c.3.s8 %v63
  %vm68 = vcmp.eq.s32.totalorder %v64, 1
  %vm69 = vcmp.eq.s32.totalorder %v65, 1
  %vm70 = vcmp.eq.s32.totalorder %v66, 1
  %vm71 = vcmp.eq.s32.totalorder %v67, 1
  %v72 = vsub.f32 0.0, %v59
  %v73 = vsub.f32 0.0, %v60
  %v74 = vsub.f32 0.0, %v61
  %v75 = vsub.f32 0.0, %v62
  %v76 = vsel %vm68, %v59, %v72
  %v77 = vsel %vm69, %v60, %v73
  %v78 = vsel %vm70, %v61, %v74
  %v79 = vsel %vm71, %v62, %v75
  %v80 = vmul.f32 %v76, 2.0
  %v81 = vmul.f32 %v77, 2.0
  %v82 = vmul.f32 %v78, 2.0
  %v83 = vmul.f32 %v79, 2.0
  %v84 = vadd.f32 %v80, 1.0
  %v85 = vadd.f32 %v81, 1.0
  %v86 = vadd.f32 %v82, 1.0
  %v87 = vadd.f32 %v83, 1.0
  %v88 = vmin.f32 %v84, 0.0
  %v89 = vmin.f32 %v85, 0.0
  %v90 = vmin.f32 %v86, 0.0
  %v91 = vmin.f32 %v87, 0.0
  %v92 = vand.u32 2147483647, %v84
  %v93 = vand.u32 2147483647, %v85
  %v94 = vand.u32 2147483647, %v86
  %v95 = vand.u32 2147483647, %v87
  %v96 = vsub.f32 0.0, %v92
  %v97 = vsub.f32 0.0, %v93
  %v98 = vsub.f32 0.0, %v94
  %v99 = vsub.f32 0.0, %v95
  %v100 = vmul.f32 %v96, 1.442695
  %v101 = vpow.pop %v100
  %v102 = vmul.f32 %v97, 1.442695
  %v103 = vpow.pop %v102
  %v104 = vmul.f32 %v98, 1.442695
  %v105 = vpow.pop %v104
  %v106 = vmul.f32 %v99, 1.442695
  %v107 = vpow.pop %v106
  %v108 = vadd.f32 %v101, 1.0
  %v109 = vlog2.pop %v108
  %v110 = vmul.f32 %v109, 0.6931472
  %v111 = vmul.f32 -0.5, %v101
  %v112 = vadd.f32 %v111, 1.0
  %v113 = vmul.f32 %v112, %v101
  %v114 = vand.u32 2147483647, %v101
  %vm115 = vcmp.lt.f32.partialorder %v114, 0.0004427343
  %v116 = vsel %vm115, %v113, %v110
  %v117 = vadd.f32 %v103, 1.0
  %v118 = vlog2.pop %v117
  %v119 = vmul.f32 %v118, 0.6931472
  %v120 = vmul.f32 -0.5, %v103
  %v121 = vadd.f32 %v120, 1.0
  %v122 = vmul.f32 %v121, %v103
  %v123 = vand.u32 2147483647, %v103
  %vm124 = vcmp.lt.f32.partialorder %v123, 0.0004427343
  %v125 = vsel %vm124, %v122, %v119
  %v126 = vadd.f32 %v105, 1.0
  %v127 = vlog2.pop %v126
  %v128 = vmul.f32 %v127, 0.6931472
  %v129 = vmul.f32 -0.5, %v105
  %v130 = vadd.f32 %v129, 1.0
  %v131 = vmul.f32 %v130, %v105
  %v132 = vand.u32 2147483647, %v105
  %vm133 = vcmp.lt.f32.partialorder %v132, 0.0004427343
  %v134 = vsel %vm133, %v131, %v128
  %v135 = vadd.f32 %v107, 1.0
  %v136 = vlog2.pop %v135
  %v137 = vmul.f32 %v136, 0.6931472
  %v138 = vmul.f32 -0.5, %v107
  %v139 = vadd.f32 %v138, 1.0
  %v140 = vmul.f32 %v139, %v107
  %v141 = vand.u32 2147483647, %v107
  %vm142 = vcmp.lt.f32.partialorder %v141, 0.0004427343
  %v143 = vsel %vm142, %v140, %v137
  %v144 = vsub.f32 %v88, %v116
  %v145 = vsub.f32 %v89, %v125
  %v146 = vsub.f32 %v90, %v134
  %v147 = vsub.f32 %v91, %v143
  %vm148 = vcmp.eq.s32.totalorder %v64, 0
  %vm149 = vcmp.eq.s32.totalorder %v65, 0
  %vm150 = vcmp.eq.s32.totalorder %v66, 0
  %vm151 = vcmp.eq.s32.totalorder %v67, 0
  %v152 = vsel %vm148, -0.375, 0.0
  %v153 = vsel %vm149, -0.375, 0.0
  %v154 = vsel %vm150, -0.375, 0.0
  %v155 = vsel %vm151, -0.375, 0.0
  %v156 = vsel %vm68, -0.125, %v152
  %v157 = vsel %vm69, -0.125, %v153
  %v158 = vsel %vm70, -0.125, %v154
  %v159 = vsel %vm71, -0.125, %v155
  %v160 = vmul.f32 %v156, %v144
  %v161 = vmul.f32 %v157, %v145
  %v162 = vmul.f32 %v158, %v146
  %v163 = vmul.f32 %v159, %v147
  %v164 = vld [vmem:[%s2] sm:$0xff]
  %v165 = vadd.f32 %v160, %v161
  %v166 = vadd.f32 %v165, %v162
  %v167 = vadd.f32 %v166, %v163
  %v168 = vadd.f32 %v164, %v167
  %169 = vst [vmem:[%s2] sm:$0xff] %v168
  // Predicated region
  $region14: #{_focal_loss_impl.1} parent=0 // pred_check
    _
  $region15: #{_focal_loss_impl.1} parent=0 // pred_check_branch
    %171 = sbr.rel (0) target = $region17
  $region16: #{_focal_loss_impl.1} parent=0 // pred_region
    _
  $region17: #{_focal_loss_impl.1} parent=0 // pred_fallthru
    _
  // Predicated region
  $region18: #{_focal_loss_impl.1} parent=0 // pred_check
    _
  $region19: #{_focal_loss_impl.1} parent=0 // pred_check_branch
    %173 = sbr.rel (0) target = $region21
  $region20: #{_focal_loss_impl.1} parent=0 // pred_region
    _
  $region21: #{_focal_loss_impl.1} parent=0 // pred_fallthru
    _

</llo_original>
